<compile_context>
chip_gen: v7x
topology: tpu7x:2x2x1
jax: 0.10.0
libtpu: 0.0.40
codegen_flags: <defaults>
</compile_context>

<pallas_src>
import jax
import jax.numpy as jnp
from jax.experimental import pallas as pl
from jax.experimental.pallas import tpu as pltpu


def _mean_pool_fc_kernel(hs_ref, mask_ref, w_ref, b_ref, out_ref,
                         num_acc, den_acc):
    """Fused masked-mean pooling (reduction over S) + linear head, tiled (B, S).

    hs_ref   : (Bb, Sb, H)  bf16/f32  last-hidden-state tile (native dtype)
    mask_ref : (Bb, 1, Sb)  same dtype as hs, attention-mask tile (0/1)
    w_ref    : (H, T)       f32       fc weight (transposed), grid-resident
    b_ref    : (1, T)       f32       fc bias, grid-resident
    out_ref  : (Bb, T)      f32       logits tile
    num_acc  : (Bb, 1, H)   f32 VMEM  running sum_s(mask * hs)
    den_acc  : (Bb, 1)      f32 VMEM  running sum_s(mask)
    """
    s = pl.program_id(1)

    @pl.when(s == 0)
    def _init():
        num_acc[...] = jnp.zeros_like(num_acc)
        den_acc[...] = jnp.zeros_like(den_acc)

    hs = hs_ref[...]        # (Bb, Sb, H), kept in native (bf16) dtype
    mask = mask_ref[...]    # (Bb, 1, Sb), same dtype as hs

    # Masked S-reduction on the MXU: num[b, h] += sum_s mask[b, s] * hs[b, s, h]
    # bf16 x bf16 with f32 accumulation (products are exact in f32).
    num_acc[...] += jnp.einsum('bms,bsh->bmh', mask, hs,
                               preferred_element_type=jnp.float32)
    # Token count (exact): mask elements are 0/1; f32 cast only on the tiny
    # (Bb, Sb) mask so long sequences don't lose counts to bf16 rounding.
    den_acc[...] += jnp.sum(mask.astype(jnp.float32), axis=2)

    @pl.when(s == pl.num_programs(1) - 1)
    def _finalize():
        # Guard: an all-padded row yields a huge finite value instead of the
        # reference's inf/nan (intentional divergence; real rows have >=1 token).
        den = jnp.maximum(den_acc[...], 1e-9)          # (Bb, 1)
        feature = num_acc[...][:, 0, :] / den          # exact divide, (Bb, H)
        # T is tiny (1 here) so this one-shot matmul per output tile is
        # negligible; it also stays correct for larger multi-class heads.
        out = jnp.dot(feature, w_ref[...], preferred_element_type=jnp.float32)
        out_ref[...] = (out + b_ref[...]).astype(out_ref.dtype)


def _round_up(x, m):
    return ((x + m - 1) // m) * m


def _pick_batch_tile(B, target):
    """Largest multiple-of-8 tile <= target that divides B, preferring >=2
    blocks (so the 'parallel' batch axis can be split across v7x's two
    TensorCores). Falls back to the full batch (block == extent is legal)."""
    best = None
    t = (min(target, B) // 8) * 8
    while t >= 8:
        if B % t == 0:
            if B // t >= 2:
                return t
            if best is None:
                best = t
        t -= 8
    return best if best is not None else B


def custom_model_forward(last_hidden_states, attention_mask, fc_weight, fc_bias,
                         *, block_b=8, block_s=1024):
    """JAX wrapper reproducing CustomModel.forward semantics (post-backbone).

    last_hidden_states : (B, S, H)  bf16 or f32 (kept in native dtype in HBM)
    attention_mask     : (B, S)     any numeric dtype (cast to hs dtype, 0/1)
    fc_weight          : (T, H)     PyTorch nn.Linear weight layout
    fc_bias            : (T,)
    returns            : (B, T)     f32 logits
    """
    B, S, H = last_hidden_states.shape
    T = fc_weight.shape[0]
    hs_dtype = last_hidden_states.dtype
    itemsize = jnp.dtype(hs_dtype).itemsize

    bb = _pick_batch_tile(B, block_b)
    # S tile: always a multiple of 128; sequence is zero-padded to a multiple
    # of the tile (mask zeroes padding), so no full-S fallback can blow VMEM.
    sb = min(_round_up(max(block_s, 128), 128), _round_up(S, 128))

    # Size tiles against the per-generation VMEM budget and set the scoped
    # limit explicitly (v5e default scoped VMEM is only 16 MiB; v7x physical
    # VMEM is 64 MiB, v5e/v6e 128 MiB).
    try:
        vmem_cap = int(pltpu.get_tpu_info().vmem_capacity_bytes)
    except Exception:
        vmem_cap = 64 * 1024 * 1024  # conservative (v7x) fallback
    budget = int(vmem_cap * 0.6)

    def _vmem_est(bb_, sb_):
        hs_tile = bb_ * sb_ * H * itemsize
        mask_tile = bb_ * sb_ * itemsize
        w_bytes = H * T * 4
        b_bytes = T * 4
        out_tile = bb_ * T * 4
        acc = bb_ * H * 4 + bb_ * 8 * 4
        return 2 * (hs_tile + mask_tile + w_bytes + b_bytes + out_tile) + acc

    while _vmem_est(bb, sb) > budget and sb > 128:
        sb = max(128, (sb // 2) // 128 * 128)

    S_pad = _round_up(S, sb)
    hs = last_hidden_states                              # no upcast in HBM
    mask = attention_mask.astype(hs_dtype).reshape(B, 1, S)  # bf16 mask, M=1
    if S_pad != S:
        hs = jnp.pad(hs, ((0, 0), (0, S_pad - S), (0, 0)))
        mask = jnp.pad(mask, ((0, 0), (0, 0), (0, S_pad - S)))

    w_t = fc_weight.astype(jnp.float32).T                # (H, T)
    b2 = fc_bias.astype(jnp.float32).reshape(1, T)       # (1, T)

    grid = (B // bb, S_pad // sb)   # reduction axis (S) last

    vmem_limit = int(min(max(_vmem_est(bb, sb) * 5 // 4 + (4 << 20), 32 << 20),
                         int(vmem_cap * 0.9)))

    out = pl.pallas_call(
        _mean_pool_fc_kernel,
        out_shape=jax.ShapeDtypeStruct((B, T), jnp.float32),
        grid=grid,
        in_specs=[
            pl.BlockSpec((bb, sb, H), lambda b, s: (b, s, 0)),
            pl.BlockSpec((bb, 1, sb), lambda b, s: (b, 0, s)),
            pl.BlockSpec((H, T), lambda b, s: (0, 0)),    # resident across grid
            pl.BlockSpec((1, T), lambda b, s: (0, 0)),    # resident across grid
        ],
        out_specs=pl.BlockSpec((bb, T), lambda b, s: (b, 0)),
        scratch_shapes=[
            pltpu.VMEM((bb, 1, H), jnp.float32),   # num accumulator
            pltpu.VMEM((bb, 1), jnp.float32),      # den accumulator
        ],
        compiler_params=pltpu.CompilerParams(
            dimension_semantics=("parallel", "arbitrary"),
            vmem_limit_bytes=vmem_limit),
    )(hs, mask, w_t, b2)
    return out


def reference_forward(last_hidden_states, attention_mask, fc_weight, fc_bias):
    """Pure-JAX reference mirroring the PyTorch code line-by-line."""
    hs = last_hidden_states.astype(jnp.float32)
    mask = attention_mask.astype(jnp.float32)[:, :, None]     # unsqueeze(2)
    feature = jnp.sum(hs * mask, axis=1) / jnp.sum(mask, axis=1)
    return feature @ fc_weight.astype(jnp.float32).T + fc_bias.astype(jnp.float32)


if __name__ == "__main__":
    key = jax.random.PRNGKey(0)
    k_hs, k_mask, k_w = jax.random.split(key, 3)

    # Small synthetic shapes consistent with the module's forward:
    # batch=2, seq=8, hidden=32, target_size=1
    B, S, H, T = 2, 8, 32, 1
    initializer_range = 0.02  # as used by _init_weights (std=initializer_range)

    # Backbone output kept in bf16 (what a real encoder would emit on TPU).
    last_hidden_states = jax.random.normal(
        k_hs, (B, S, H), dtype=jnp.float32).astype(jnp.bfloat16)

    # Attention mask: first few tokens valid, rest padded (at least 1 valid).
    lengths = jnp.array([5, 8], dtype=jnp.int32)
    attention_mask = (jnp.arange(S)[None, :] < lengths[:, None]).astype(jnp.float32)

    # fc: Linear(hidden_size, target_size); weight ~ N(0, init_range), bias = 0.
    fc_weight = initializer_range * jax.random.normal(k_w, (T, H), dtype=jnp.float32)
    fc_bias = jnp.zeros((T,), dtype=jnp.float32)

    out = custom_model_forward(last_hidden_states, attention_mask, fc_weight, fc_bias)
    out = jax.block_until_ready(out)

    ref = reference_forward(last_hidden_states, attention_mask, fc_weight, fc_bias)
    assert out.shape == (B, T)
    assert jnp.allclose(out, ref, atol=1e-3, rtol=1e-3), (out, ref)

    print("KERNEL_OK")
</pallas_src>

<mosaic_0001>
module attributes {stable_mosaic.version = 11 : i64} {
  func.func @_mean_pool_fc_kernel(%arg0: i32, %arg1: i32, %arg2: memref<2x128x32xbf16, #tpu.memory_space<vmem>>, %arg3: memref<2x1x128xbf16, #tpu.memory_space<vmem>>, %arg4: memref<32x1xf32, #tpu.memory_space<vmem>>, %arg5: memref<1x1xf32, #tpu.memory_space<vmem>>, %arg6: memref<2x1xf32, #tpu.memory_space<vmem>>, %arg7: memref<2x1x32xf32, #tpu.memory_space<vmem>>, %arg8: memref<2x1xf32, #tpu.memory_space<vmem>>) attributes {dimension_semantics = [#tpu.dimension_semantics<parallel>, #tpu.dimension_semantics<arbitrary>], iteration_bounds = array<i64: 1, 1>, scalar_prefetch = 0 : i64, scratch_operands = 2 : i64, tpu.core_type = #tpu.core_type<tc>, window_params = [{transform_indices = @transform_0, window_bounds = array<i64: 2, 128, 32>}, {transform_indices = @transform_1, window_bounds = array<i64: 2, 1, 128>}, {pipeline_mode = #tpu.pipeline_mode<synchronous>, transform_indices = @transform_2, window_bounds = array<i64: 32, 1>}, {pipeline_mode = #tpu.pipeline_mode<synchronous>, transform_indices = @transform_3, window_bounds = array<i64: 1, 1>}, {transform_indices = @transform_4, window_bounds = array<i64: 2, 1>}]} {
    %c0_i32 = arith.constant 0 : i32
    %0 = arith.cmpi eq, %arg1, %c0_i32 : i32
    %1 = arith.extui %0 : i1 to i32
    %c0_i32_0 = arith.constant 0 : i32
    %2 = arith.cmpi ne, %1, %c0_i32_0 : i32
    scf.if %2 {
      %cst_19 = arith.constant 0.000000e+00 : f32
      %17 = vector.broadcast %cst_19 : f32 to vector<2x1x32xf32>
      %c0_20 = arith.constant 0 : index
      %c0_21 = arith.constant 0 : index
      %c0_22 = arith.constant 0 : index
      %18 = vector.load %arg7[%c0_20, %c0_21, %c0_22] : memref<2x1x32xf32, #tpu.memory_space<vmem>>, vector<2x1x32xf32>
      tpu.vector_store %arg7[%c0_20, %c0_21, %c0_22], %17 {strides = array<i32>} : memref<2x1x32xf32, #tpu.memory_space<vmem>>, vector<2x1x32xf32>,
      %cst_23 = arith.constant 0.000000e+00 : f32
      %19 = vector.broadcast %cst_23 : f32 to vector<2x1xf32>
      %c0_24 = arith.constant 0 : index
      %c0_25 = arith.constant 0 : index
      %20 = vector.load %arg8[%c0_24, %c0_25] : memref<2x1xf32, #tpu.memory_space<vmem>>, vector<2x1xf32>
      tpu.vector_store %arg8[%c0_24, %c0_25], %19 {strides = array<i32>} : memref<2x1xf32, #tpu.memory_space<vmem>>, vector<2x1xf32>,
    } else {
    }
    %c0 = arith.constant 0 : index
    %c0_1 = arith.constant 0 : index
    %c0_2 = arith.constant 0 : index
    %3 = vector.load %arg2[%c0, %c0_1, %c0_2] : memref<2x128x32xbf16, #tpu.memory_space<vmem>>, vector<2x128x32xbf16>
    %c0_3 = arith.constant 0 : index
    %c0_4 = arith.constant 0 : index
    %c0_5 = arith.constant 0 : index
    %4 = vector.load %arg3[%c0_3, %c0_4, %c0_5] : memref<2x1x128xbf16, #tpu.memory_space<vmem>>, vector<2x1x128xbf16>
    %c0_6 = arith.constant 0 : index
    %c0_7 = arith.constant 0 : index
    %c0_8 = arith.constant 0 : index
    %5 = vector.load %arg7[%c0_6, %c0_7, %c0_8] : memref<2x1x32xf32, #tpu.memory_space<vmem>>, vector<2x1x32xf32>
    "tpu.trace_start"() <{level = 10 : i32, message = "bms,bsh->bmh"}> : () -> ()
    %cst = arith.constant dense<0.000000e+00> : vector<2x1x32xf32>
    %6 = tpu.matmul %4, %3, %cst {dimension_numbers = #tpu.dot_dimension_numbers<[2], [1], [1], [2], [0, 0, 0, 1, 1, 2], [0], [0]>} : vector<2x1x128xbf16>, vector<2x128x32xbf16>, vector<2x1x32xf32> -> vector<2x1x32xf32>
    "tpu.trace_stop"() : () -> ()
    %7 = arith.addf %5, %6 : vector<2x1x32xf32>
    %c0_9 = arith.constant 0 : index
    %c0_10 = arith.constant 0 : index
    %c0_11 = arith.constant 0 : index
    %8 = vector.load %arg7[%c0_9, %c0_10, %c0_11] : memref<2x1x32xf32, #tpu.memory_space<vmem>>, vector<2x1x32xf32>
    tpu.vector_store %arg7[%c0_9, %c0_10, %c0_11], %7 {strides = array<i32>} : memref<2x1x32xf32, #tpu.memory_space<vmem>>, vector<2x1x32xf32>,
    %c0_12 = arith.constant 0 : index
    %c0_13 = arith.constant 0 : index
    %9 = vector.load %arg8[%c0_12, %c0_13] : memref<2x1xf32, #tpu.memory_space<vmem>>, vector<2x1xf32>
    %10 = arith.extf %4 : vector<2x1x128xbf16> to vector<2x1x128xf32>
    %cst_14 = arith.constant dense<0.000000e+00> : vector<2x1xf32>
    %11 = vector.multi_reduction <add>, %10, %cst_14 [2] : vector<2x1x128xf32> to vector<2x1xf32>
    %12 = arith.addf %9, %11 : vector<2x1xf32>
    %c0_15 = arith.constant 0 : index
    %c0_16 = arith.constant 0 : index
    %13 = vector.load %arg8[%c0_15, %c0_16] : memref<2x1xf32, #tpu.memory_space<vmem>>, vector<2x1xf32>
    tpu.vector_store %arg8[%c0_15, %c0_16], %12 {strides = array<i32>} : memref<2x1xf32, #tpu.memory_space<vmem>>, vector<2x1xf32>,
    %c0_i32_17 = arith.constant 0 : i32
    %14 = arith.cmpi eq, %arg1, %c0_i32_17 : i32
    %15 = arith.extui %14 : i1 to i32
    %c0_i32_18 = arith.constant 0 : i32
    %16 = arith.cmpi ne, %15, %c0_i32_18 : i32
    scf.if %16 {
      %c0_19 = arith.constant 0 : index
      %c0_20 = arith.constant 0 : index
      %17 = vector.load %arg8[%c0_19, %c0_20] : memref<2x1xf32, #tpu.memory_space<vmem>>, vector<2x1xf32>
      %cst_21 = arith.constant 9.99999971E-10 : f32
      %18 = vector.broadcast %cst_21 : f32 to vector<2x1xf32>
      %19 = arith.maximumf %17, %18 : vector<2x1xf32>
      %c0_22 = arith.constant 0 : index
      %c0_23 = arith.constant 0 : index
      %c0_24 = arith.constant 0 : index
      %20 = vector.load %arg7[%c0_22, %c0_23, %c0_24] : memref<2x1x32xf32, #tpu.memory_space<vmem>>, vector<2x1x32xf32>
      %21 = vector.shape_cast %20 : vector<2x1x32xf32> to vector<2x32xf32>
      %22 = vector.broadcast %19 : vector<2x1xf32> to vector<2x32xf32>
      %23 = arith.divf %21, %22 : vector<2x32xf32>
      %c0_25 = arith.constant 0 : index
      %c0_26 = arith.constant 0 : index
      %24 = vector.load %arg4[%c0_25, %c0_26] : memref<32x1xf32, #tpu.memory_space<vmem>>, vector<32x1xf32>
      %cst_27 = arith.constant dense<0.000000e+00> : vector<2x1xf32>
      %25 = tpu.matmul %23, %24, %cst_27 {dimension_numbers = #tpu.dot_dimension_numbers<[1], [0], [0], [1], [0, 0, 1, 1], [], []>} : vector<2x32xf32>, vector<32x1xf32>, vector<2x1xf32> -> vector<2x1xf32>
      %c0_28 = arith.constant 0 : index
      %c0_29 = arith.constant 0 : index
      %26 = vector.load %arg5[%c0_28, %c0_29] : memref<1x1xf32, #tpu.memory_space<vmem>>, vector<1x1xf32>
      %27 = vector.broadcast %26 : vector<1x1xf32> to vector<2x1xf32>
      %28 = arith.addf %25, %27 : vector<2x1xf32>
      %c0_30 = arith.constant 0 : index
      %c0_31 = arith.constant 0 : index
      %29 = vector.load %arg6[%c0_30, %c0_31] : memref<2x1xf32, #tpu.memory_space<vmem>>, vector<2x1xf32>
      tpu.vector_store %arg6[%c0_30, %c0_31], %28 {strides = array<i32>} : memref<2x1xf32, #tpu.memory_space<vmem>>, vector<2x1xf32>,
    } else {
    }
    return
  }
  func.func @transform_0(%arg0: i32, %arg1: i32) -> (i32, i32, i32) {
    %c0_i32 = arith.constant 0 : i32
    %c0_i32_0 = arith.constant 0 : i32
    return %arg0, %arg1, %c0_i32 : i32, i32, i32
  }
  func.func @transform_1(%arg0: i32, %arg1: i32) -> (i32, i32, i32) {
    %c0_i32 = arith.constant 0 : i32
    %c0_i32_0 = arith.constant 0 : i32
    return %arg0, %c0_i32, %arg1 : i32, i32, i32
  }
  func.func @transform_2(%arg0: i32, %arg1: i32) -> (i32, i32) {
    %c0_i32 = arith.constant 0 : i32
    %c0_i32_0 = arith.constant 0 : i32
    %c0_i32_1 = arith.constant 0 : i32
    return %c0_i32, %c0_i32_0 : i32, i32
  }
  func.func @transform_3(%arg0: i32, %arg1: i32) -> (i32, i32) {
    %c0_i32 = arith.constant 0 : i32
    %c0_i32_0 = arith.constant 0 : i32
    %c0_i32_1 = arith.constant 0 : i32
    return %c0_i32, %c0_i32_0 : i32, i32
  }
  func.func @transform_4(%arg0: i32, %arg1: i32) -> (i32, i32) {
    %c0_i32 = arith.constant 0 : i32
    %c0_i32_0 = arith.constant 0 : i32
    return %arg0, %c0_i32 : i32, i32
  }
}

</mosaic_0001>

<llo_original>
// kernel: tpu_custom_call.1
$region0: #{tpu_custom_call.1}
  #allocation0 [shape = 'u32[]', space=smem, size = 0x4, offset = 0x4, fixed_abs, tag = 'smem constant byte address 0x4 - core index']
  #allocation1 [shape = 'u32[144,128]{1,0:T(1,128)}', space=vmem, size = 0x12000, scoped, tag = 'internal scratch']
  #allocation2 [shape = 'f32[2,1,32]{2,1,0:T(1,128)}', space=vmem, size = 0x400, scoped, tag = 'scratch operand']
  #allocation3 [shape = 'f32[2,1]{1,0:T(2,128)}', space=vmem, size = 0x400, scoped, tag = 'scratch operand']
  #allocation4 [shape = 'f32[1,1]{1,0:T(1,128)S(1)}', space=vmem, size = 0x200, scoped, tag = 'scoped memory for tpu_custom_call.1']
  %s0 = inlined_call_operand.vmem [shape: bf16[2,128,32], index: 0, kind: input, shape index: {}]
  %s1 = inlined_call_operand.vmem [shape: bf16[2,1,128], index: 1, kind: input, shape index: {}]
  %s2 = inlined_call_operand.vmem [shape: f32[32,1], index: 2, kind: input, shape index: {}]
  %s3 = inlined_call_operand.<no memory space> [shape: f32[1,1], index: 3, kind: input, shape index: {}]
  %s4 = inlined_call_operand.vmem [shape: f32[2,1], index: 4, kind: output, shape index: {}]
  %s5 = sld [smem:[#allocation0]]
  $region34: #{tpu_custom_call.1} parent=0
    _
  %s7 = ssub.s32 1, %s5
  %s8 = scalar_select 0, %s7, %s5
  %v9 = vstv %s3
  %10 = vst [vmem:[#allocation4] sm:$0x1] %v9
  // Predicated region
  $region2: #{tpu_custom_call.1} parent=0 // pred_check
    _
  $region3: #{tpu_custom_call.1} parent=0 // pred_check_branch
    %12 = sbr.rel (0) target = $region5
  $region4: #{tpu_custom_call.1} parent=0 // pred_region
    _
  $region5: #{tpu_custom_call.1} parent=0 // pred_fallthru
    _
  // Predicated region
  $region6: #{tpu_custom_call.1} parent=0 // pred_check
    _
  $region7: #{tpu_custom_call.1} parent=0 // pred_check_branch
    %14 = sbr.rel (0) target = $region9
  $region8: #{tpu_custom_call.1} parent=0 // pred_region
    _
  $region9: #{tpu_custom_call.1} parent=0 // pred_fallthru
    _
  // Predicated region
  $region10: #{tpu_custom_call.1} parent=0 // pred_check
    _
  $region11: #{tpu_custom_call.1} parent=0 // pred_check_branch
    %16 = sbr.rel (0) target = $region13
  $region12: #{tpu_custom_call.1} parent=0 // pred_region
    _
  $region13: #{tpu_custom_call.1} parent=0 // pred_fallthru
    _
  // Predicated region
  $region14: #{tpu_custom_call.1} parent=0 // pred_check
    _
  $region15: #{tpu_custom_call.1} parent=0 // pred_check_branch
    %18 = sbr.rel (0) target = $region17
  $region16: #{tpu_custom_call.1} parent=0 // pred_region
    _
  $region17: #{tpu_custom_call.1} parent=0 // pred_fallthru
    _
  %p20 = scmp.eq.s32.totalorder 0, 0
  // Predicated region
  $region18: #{tpu_custom_call.1} parent=0 // pred_check
    %p21 = pneg %p20
  $region19: #{tpu_custom_call.1} parent=0 // pred_check_branch
    %23 = sbr.rel (%p21) target = $region21
  $region20: #{tpu_custom_call.1} parent=0 // pred_region
    %vm24 = vcmask 253952
    %25 = vst.msk [vmem:[#allocation2] sm:$0x1] %vm24, 0.0
    %26 = vst.msk [vmem:[#allocation2 + $0x1] sm:$0x1] %vm24, 0.0
    %vm27 = vcmask 1024
    %28 = vst.msk [vmem:[#allocation3] sm:$0x3] %vm27, 0.0
  $region21: #{tpu_custom_call.1} parent=0 // pred_fallthru
    _
  %v29 = vld [vmem:[%s0] sm:$0xf]
  %v30 = vld [vmem:[%s0 + $0x4] sm:$0xf]
  %v31 = vld [vmem:[%s0 + $0x8] sm:$0xf]
  %v32 = vld [vmem:[%s0 + $0xc] sm:$0xf]
  %v33 = vld [vmem:[%s0 + $0x10] sm:$0xf]
  %v34 = vld [vmem:[%s0 + $0x14] sm:$0xf]
  %v35 = vld [vmem:[%s0 + $0x18] sm:$0xf]
  %v36 = vld [vmem:[%s0 + $0x1c] sm:$0xf]
  %v37 = vld [vmem:[%s0 + $0x20] sm:$0xf]
  %v38 = vld [vmem:[%s0 + $0x24] sm:$0xf]
  %v39 = vld [vmem:[%s0 + $0x28] sm:$0xf]
  %v40 = vld [vmem:[%s0 + $0x2c] sm:$0xf]
  %v41 = vld [vmem:[%s0 + $0x30] sm:$0xf]
  %v42 = vld [vmem:[%s0 + $0x34] sm:$0xf]
  %v43 = vld [vmem:[%s0 + $0x38] sm:$0xf]
  %v44 = vld [vmem:[%s0 + $0x3c] sm:$0xf]
  %v45 = vld [vmem:[%s0 + $0x40] sm:$0xf]
  %v46 = vld [vmem:[%s0 + $0x44] sm:$0xf]
  %v47 = vld [vmem:[%s0 + $0x48] sm:$0xf]
  %v48 = vld [vmem:[%s0 + $0x4c] sm:$0xf]
  %v49 = vld [vmem:[%s0 + $0x50] sm:$0xf]
  %v50 = vld [vmem:[%s0 + $0x54] sm:$0xf]
  %v51 = vld [vmem:[%s0 + $0x58] sm:$0xf]
  %v52 = vld [vmem:[%s0 + $0x5c] sm:$0xf]
  %v53 = vld [vmem:[%s0 + $0x60] sm:$0xf]
  %v54 = vld [vmem:[%s0 + $0x64] sm:$0xf]
  %v55 = vld [vmem:[%s0 + $0x68] sm:$0xf]
  %v56 = vld [vmem:[%s0 + $0x6c] sm:$0xf]
  %v57 = vld [vmem:[%s0 + $0x70] sm:$0xf]
  %v58 = vld [vmem:[%s0 + $0x74] sm:$0xf]
  %v59 = vld [vmem:[%s0 + $0x78] sm:$0xf]
  %v60 = vld [vmem:[%s0 + $0x7c] sm:$0xf]
  %v61 = vld [vmem:[%s1] sm:$0x1]
  %v62 = vld [vmem:[%s1 + $0x1] sm:$0x1]
  %v63 = vld [vmem:[#allocation2] sm:$0x1]
  %v64 = vld [vmem:[#allocation2 + $0x1] sm:$0x1]
  %v81 = vunpack.c.l.b16 %v29
  %v82 = vunpack.c.l.b16 %v30
  %v83 = vunpack.c.l.b16 %v31
  %v84 = vunpack.c.l.b16 %v32
  %v85 = vunpack.c.l.b16 %v33
  %v86 = vunpack.c.l.b16 %v34
  %v87 = vunpack.c.l.b16 %v35
  %v88 = vunpack.c.l.b16 %v36
  %v89 = vunpack.c.l.b16 %v37
  %v90 = vunpack.c.l.b16 %v38
  %v91 = vunpack.c.l.b16 %v39
  %v92 = vunpack.c.l.b16 %v40
  %v93 = vunpack.c.l.b16 %v41
  %v94 = vunpack.c.l.b16 %v42
  %v95 = vunpack.c.l.b16 %v43
  %v96 = vunpack.c.l.b16 %v44
  %v97 = vpack.c.b16 %v82, %v81
  %v98 = vpack.c.b16 %v84, %v83
  %v99 = vpack.c.b16 %v86, %v85
  %v100 = vpack.c.b16 %v88, %v87
  %v101 = vpack.c.b16 %v90, %v89
  %v102 = vpack.c.b16 %v92, %v91
  %v103 = vpack.c.b16 %v94, %v93
  %v104 = vpack.c.b16 %v96, %v95
  %113 = vmatprep.subr.bf16.mxu0 0
  %114 = vmatpush1.bf16.msra.mxu0 %v97
  %115 = vmatprep.subr.bf16.mxu0 0
  %116 = vmatpush1.bf16.msra.mxu0 %v98
  %117 = vmatprep.subr.bf16.mxu0 0
  %118 = vmatpush1.bf16.msra.mxu0 %v99
  %119 = vmatprep.subr.bf16.mxu0 0
  %120 = vmatpush1.bf16.msra.mxu0 %v100
  %121 = vmatprep.subr.bf16.mxu0 0
  %122 = vmatpush1.bf16.msra.mxu0 %v101
  %123 = vmatprep.subr.bf16.mxu0 0
  %124 = vmatpush1.bf16.msra.mxu0 %v102
  %125 = vmatprep.subr.bf16.mxu0 0
  %126 = vmatpush1.bf16.msra.mxu0 %v103
  %127 = vmatprep.subr.bf16.mxu0 0
  %128 = vmatpush1.bf16.msra.mxu0 %v104
  %129 = vmatprep.subr.bf16.mxu0 0
  %130 = vmatpush1.bf16.msra.mxu0 0
  %131 = vmatprep.subr.bf16.mxu0 0
  %132 = vmatpush1.bf16.msra.mxu0 0
  %133 = vmatprep.subr.bf16.mxu0 0
  %134 = vmatpush1.bf16.msra.mxu0 0
  %135 = vmatprep.subr.bf16.mxu0 0
  %136 = vmatpush1.bf16.msra.mxu0 0
  %137 = vmatprep.subr.bf16.mxu0 0
  %138 = vmatpush1.bf16.msra.mxu0 0
  %139 = vmatprep.subr.bf16.mxu0 0
  %140 = vmatpush1.bf16.msra.mxu0 0
  %141 = vmatprep.subr.bf16.mxu0 0
  %142 = vmatpush1.bf16.msra.mxu0 0
  %143 = vmatprep.subr.bf16.mxu0 0
  %144 = vmatpush1.bf16.msra.mxu0 0
  %145 = vmatprep.mubr.bf16.mxu0 0
  %146 = vmatmul.mubr.bf16.gmra.mrb[0].mxu0 %v61
  %v147 = vpop.f32.mrb[0].mxu0
  %v148 = vadd.f32 0.0, %v147
  %v149 = vpop.f32.mrb[0].mxu0
  %v150 = vpop.f32.mrb[0].mxu0
  %v151 = vpop.f32.mrb[0].mxu0
  %152 = vdwg.mxu0
  %v169 = vunpack.c.l.b16 %v45
  %v170 = vunpack.c.l.b16 %v46
  %v171 = vunpack.c.l.b16 %v47
  %v172 = vunpack.c.l.b16 %v48
  %v173 = vunpack.c.l.b16 %v49
  %v174 = vunpack.c.l.b16 %v50
  %v175 = vunpack.c.l.b16 %v51
  %v176 = vunpack.c.l.b16 %v52
  %v177 = vunpack.c.l.b16 %v53
  %v178 = vunpack.c.l.b16 %v54
  %v179 = vunpack.c.l.b16 %v55
  %v180 = vunpack.c.l.b16 %v56
  %v181 = vunpack.c.l.b16 %v57
  %v182 = vunpack.c.l.b16 %v58
  %v183 = vunpack.c.l.b16 %v59
  %v184 = vunpack.c.l.b16 %v60
  %v185 = vpack.c.b16 %v170, %v169
  %v186 = vpack.c.b16 %v172, %v171
  %v187 = vpack.c.b16 %v174, %v173
  %v188 = vpack.c.b16 %v176, %v175
  %v189 = vpack.c.b16 %v178, %v177
  %v190 = vpack.c.b16 %v180, %v179
  %v191 = vpack.c.b16 %v182, %v181
  %v192 = vpack.c.b16 %v184, %v183
  %201 = vmatprep.subr.bf16.mxu0 0
  %202 = vmatpush1.bf16.msra.mxu0 %v185
  %203 = vmatprep.subr.bf16.mxu0 0
  %204 = vmatpush1.bf16.msra.mxu0 %v186
  %205 = vmatprep.subr.bf16.mxu0 0
  %206 = vmatpush1.bf16.msra.mxu0 %v187
  %207 = vmatprep.subr.bf16.mxu0 0
  %208 = vmatpush1.bf16.msra.mxu0 %v188
  %209 = vmatprep.subr.bf16.mxu0 0
  %210 = vmatpush1.bf16.msra.mxu0 %v189
  %211 = vmatprep.subr.bf16.mxu0 0
  %212 = vmatpush1.bf16.msra.mxu0 %v190
  %213 = vmatprep.subr.bf16.mxu0 0
  %214 = vmatpush1.bf16.msra.mxu0 %v191
  %215 = vmatprep.subr.bf16.mxu0 0
  %216 = vmatpush1.bf16.msra.mxu0 %v192
  %217 = vmatprep.subr.bf16.mxu0 0
  %218 = vmatpush1.bf16.msra.mxu0 0
  %219 = vmatprep.subr.bf16.mxu0 0
  %220 = vmatpush1.bf16.msra.mxu0 0
  %221 = vmatprep.subr.bf16.mxu0 0
  %222 = vmatpush1.bf16.msra.mxu0 0
  %223 = vmatprep.subr.bf16.mxu0 0
  %224 = vmatpush1.bf16.msra.mxu0 0
  %225 = vmatprep.subr.bf16.mxu0 0
  %226 = vmatpush1.bf16.msra.mxu0 0
  %227 = vmatprep.subr.bf16.mxu0 0
  %228 = vmatpush1.bf16.msra.mxu0 0
  %229 = vmatprep.subr.bf16.mxu0 0
  %230 = vmatpush1.bf16.msra.mxu0 0
  %231 = vmatprep.subr.bf16.mxu0 0
  %232 = vmatpush1.bf16.msra.mxu0 0
  %233 = vmatprep.mubr.bf16.mxu0 0
  %234 = vmatmul.mubr.bf16.gmra.mrb[0].mxu0 %v62
  %v235 = vpop.f32.mrb[0].mxu0
  %v236 = vadd.f32 0.0, %v235
  %v237 = vpop.f32.mrb[0].mxu0
  %v238 = vpop.f32.mrb[0].mxu0
  %v239 = vpop.f32.mrb[0].mxu0
  %240 = vdwg.mxu0
  %v241 = vadd.f32 %v63, %v148
  %v242 = vadd.f32 %v64, %v236
  %vm243 = vcmask 253952
  %244 = vst.msk [vmem:[#allocation2] sm:$0x1] %vm243, %v241
  %245 = vst.msk [vmem:[#allocation2 + $0x1] sm:$0x1] %vm243, %v242
  %v246 = vld [vmem:[#allocation3] sm:$0x3]
  %v247 = vunpack.c.l.bf16 %v61
  %v248 = vunpack.c.l.bf16 %v62
  %vm249 = vcmask 1040384
  %v250 = vsel %vm249, %v247, 0.0
  %251 = vadd.xlane.f32.xlu0 %v250
  %v252 = vpop.xlane.xlu0 %251
  %v253 = vsel %vm249, %v248, 0.0
  %254 = vadd.xlane.f32.xlu0 %v253
  %v255 = vpop.xlane.xlu0 %254
  %v258 = vrot.slane %v255, 7
  %vm259 = vcmask 1041409
  %v260 = vsel %vm259, %v258, %v252
  %v262 = vadd.f32 %v246, %v260
  %vm263 = vcmask 1024
  %264 = vst.msk [vmem:[#allocation3] sm:$0x3] %vm263, %v262
  // Predicated region
  $region22: #{tpu_custom_call.1} parent=0 // pred_check
    %p265 = pneg %p20
  $region23: #{tpu_custom_call.1} parent=0 // pred_check_branch
    %267 = sbr.rel (%p265) target = $region25
  $region24: #{tpu_custom_call.1} parent=0 // pred_region
    %v268 = vld [vmem:[#allocation3] sm:$0x3]
    %v269 = vmax.f32 %v268, 1e-09
    %v270 = vld [vmem:[#allocation2] sm:$0x1]
    %v271 = vld [vmem:[#allocation2 + $0x1] sm:$0x1]
    %273 = vset.pattern.permute.xlu0 0
    %274 = vperm.xlu0 %273, %v269
    %v275 = vpop.permute.xlu0 %274
    %v276 = vlaneseq
    %v277 = vshrl.u32 %v276, 7
    %v278 = vsub.s32 0, %v277
    %v279 = vrot.slane %v275, %v278
    %v280 = vlaneseq
    %v281 = vshrl.u32 %v280, 7
    %v282 = vsub.s32 1, %v281
    %v283 = vrot.slane %v275, %v282
    %v286 = vrcp.pop %v279
    %v287 = vmul.f32 %v270, %v286
    %v288 = vrcp.pop %v283
    %v289 = vmul.f32 %v271, %v288
    %v290 = vld [vmem:[%s2] sm:$0xff]
    %v291 = vld [vmem:[%s2 + $0x8] sm:$0xff]
    %v292 = vld [vmem:[%s2 + $0x10] sm:$0xff]
    %v293 = vld [vmem:[%s2 + $0x18] sm:$0xff]
    %v294 = vld [vmem:[#allocation4] sm:$0x1]
    %v296 = vlaneseq
    %v297 = vshrl.u32 %v296, 7
    %v298 = vsub.s32 0, %v297
    %v299 = vrot.slane %v294, %v298
    %v303 = vcombine.low %v287, %v289
    %v305 = vunpack.c.l.s4 1966171168
    %v306 = vunpack.c.0.s8 %v305
    %v307 = vlaneseq
    %v308 = vshrl.u32 %v307, 7
    %v309 = vsub.s32 %v306, %v308
    %v310 = vrot.slane %v303, %v309
    %v312 = vunpack.c.l.s4 1966171168
    %v313 = vunpack.c.0.s8 %v312
    %v314 = vlaneseq
    %v315 = vshrl.u32 %v314, 7
    %v316 = vsub.s32 %v313, %v315
    %v317 = vrot.slane %v310, %v316
    %vm318 = vcmask 261120
    %v319 = vsel %vm318, %v317, 0
    %321 = vmatprep.subr.mxu0 0.0
    %322 = vmatpush1.msra.mxu0 %v290
    %323 = vmatprep.subr.mxu0 0.0
    %324 = vmatpush1.msra.mxu0 %v291
    %325 = vmatprep.subr.mxu0 0.0
    %326 = vmatpush1.msra.mxu0 %v292
    %327 = vmatprep.subr.mxu0 0.0
    %328 = vmatpush1.msra.mxu0 %v293
    %329 = vmatprep.subr.mxu0 0.0
    %330 = vmatpush1.msra.mxu0 0.0
    %331 = vmatprep.subr.mxu0 0.0
    %332 = vmatpush1.msra.mxu0 0.0
    %333 = vmatprep.subr.mxu0 0.0
    %334 = vmatpush1.msra.mxu0 0.0
    %335 = vmatprep.subr.mxu0 0.0
    %336 = vmatpush1.msra.mxu0 0.0
    %337 = vmatprep.subr.mxu0 0.0
    %338 = vmatpush1.msra.mxu0 0.0
    %339 = vmatprep.subr.mxu0 0.0
    %340 = vmatpush1.msra.mxu0 0.0
    %341 = vmatprep.subr.mxu0 0.0
    %342 = vmatpush1.msra.mxu0 0.0
    %343 = vmatprep.subr.mxu0 0.0
    %344 = vmatpush1.msra.mxu0 0.0
    %345 = vmatprep.subr.mxu0 0.0
    %346 = vmatpush1.msra.mxu0 0.0
    %347 = vmatprep.subr.mxu0 0.0
    %348 = vmatpush1.msra.mxu0 0.0
    %349 = vmatprep.subr.mxu0 0.0
    %350 = vmatpush1.msra.mxu0 0.0
    %351 = vmatprep.subr.mxu0 0.0
    %352 = vmatpush1.msra.mxu0 0.0
    %353 = vmatprep.subr.mxu0 0.0
    %354 = vmatpush1.msra.mxu0 0.0
    %355 = vmatprep.subr.mxu0 0.0
    %356 = vmatpush1.msra.mxu0 0.0
    %357 = vmatprep.subr.mxu0 0.0
    %358 = vmatpush1.msra.mxu0 0.0
    %359 = vmatprep.subr.mxu0 0.0
    %360 = vmatpush1.msra.mxu0 0.0
    %361 = vmatprep.subr.mxu0 0.0
    %362 = vmatpush1.msra.mxu0 0.0
    %363 = vmatprep.subr.mxu0 0.0
    %364 = vmatpush1.msra.mxu0 0.0
    %365 = vmatprep.subr.mxu0 0.0
    %366 = vmatpush1.msra.mxu0 0.0
    %367 = vmatprep.subr.mxu0 0.0
    %368 = vmatpush1.msra.mxu0 0.0
    %369 = vmatprep.subr.mxu0 0.0
    %370 = vmatpush1.msra.mxu0 0.0
    %371 = vmatprep.subr.mxu0 0.0
    %372 = vmatpush1.msra.mxu0 0.0
    %373 = vmatprep.subr.mxu0 0.0
    %374 = vmatpush1.msra.mxu0 0.0
    %375 = vmatprep.subr.mxu0 0.0
    %376 = vmatpush1.msra.mxu0 0.0
    %377 = vmatprep.subr.mxu0 0.0
    %378 = vmatpush1.msra.mxu0 0.0
    %379 = vmatprep.subr.mxu0 0.0
    %380 = vmatpush1.msra.mxu0 0.0
    %381 = vmatprep.subr.mxu0 0.0
    %382 = vmatpush1.msra.mxu0 0.0
    %383 = vmatprep.subr.mxu0 0.0
    %384 = vmatpush1.msra.mxu0 0.0
    %385 = vmatprep.mubr.f32.mxu0 0.0
    %386 = vmatmul.mubr.f32.gmra.mrb[0].mxu0 %v319
    %v387 = vpop.f32.mrb[0].mxu0
    %v388 = vadd.f32 %v299, %v387
    %v389 = vpop.f32.mrb[0].mxu0
    %390 = vdwg.mxu0
    %391 = vst.msk [vmem:[%s4] sm:$0x3] %vm263, %v388
  $region25: #{tpu_custom_call.1} parent=0 // pred_fallthru
    _
  // Predicated region
  $region26: #{tpu_custom_call.1} parent=0 // pred_check
    _
  $region27: #{tpu_custom_call.1} parent=0 // pred_check_branch
    %393 = sbr.rel (0) target = $region29
  $region28: #{tpu_custom_call.1} parent=0 // pred_region
    _
  $region29: #{tpu_custom_call.1} parent=0 // pred_fallthru
    _
  // Predicated region
  $region30: #{tpu_custom_call.1} parent=0 // pred_check
    _
  $region31: #{tpu_custom_call.1} parent=0 // pred_check_branch
    %395 = sbr.rel (0) target = $region33
  $region32: #{tpu_custom_call.1} parent=0 // pred_region
    _
  $region33: #{tpu_custom_call.1} parent=0 // pred_fallthru
    _

</llo_original>
